<compile_context>
chip_gen: v7x
topology: tpu7x:2x2x1
jax: 0.10.0
libtpu: 0.0.40
codegen_flags: <defaults>
</compile_context>

<pallas_src>
import functools

import jax
import jax.numpy as jnp
from jax.experimental import pallas as pl
from jax.experimental.pallas import tpu as pltpu


def _prefix_copy_kernel(seq_len, table_ref, out_ref, copy_sem):
    # table_ref: (max_len, embed_dim) in HBM; out_ref: (1, seq_len, embed_dim) in HBM.
    # The gathered positions are arange(seq_len): a contiguous row-major prefix
    # of the embedding table, so the whole forward is one flat HBM->HBM DMA.
    cp = pltpu.make_async_copy(
        table_ref.at[pl.ds(0, seq_len)],   # (seq_len, embed_dim) prefix of the table
        out_ref.at[0],                     # (seq_len, embed_dim) view of the output
        copy_sem,
    )
    cp.start()
    cp.wait()


def positional_embedding(x: jax.Array, weight: jax.Array) -> jax.Array:
    """weight: (max_len, embed_dim). Returns weight[:seq_len][None, :, :]."""
    seq_len = x.shape[1]
    max_len, embed_dim = weight.shape
    if seq_len > max_len:
        raise ValueError(f"seq_len={seq_len} exceeds max_len={max_len}")

    # TODO(synk): when this feeds a token-embedding + positional-embedding add,
    # fuse the prefix copy into that consumer kernel instead of emitting a
    # standalone HBM->HBM copy (removes one full write + re-read of the slab).
    return pl.pallas_call(
        functools.partial(_prefix_copy_kernel, seq_len),
        out_shape=jax.ShapeDtypeStruct((1, seq_len, embed_dim), weight.dtype),
        in_specs=[pl.BlockSpec(memory_space=pl.ANY)],
        out_specs=pl.BlockSpec(memory_space=pl.ANY),
        scratch_shapes=[pltpu.SemaphoreType.DMA(())],
    )(weight)


if __name__ == "__main__":
    key = jax.random.PRNGKey(0)
    embed_dim, max_len = 32, 64
    batch, seq_len = 2, 8

    k_w, k_x = jax.random.split(key)
    # nn.Embedding(max_len, embed_dim) weight, init normal(std=0.02) — deterministic here.
    weight = 0.02 * jax.random.normal(k_w, (max_len, embed_dim), dtype=jnp.float32)
    # x is only consulted for its shape[1] (sequence length); token ids as a stand-in.
    x = jax.random.randint(k_x, (batch, seq_len), 0, max_len, dtype=jnp.int32)

    out = jax.block_until_ready(positional_embedding(x, weight))

    # Pure-JAX reference of the PyTorch forward.
    ref = weight[jnp.arange(seq_len)][None, :, :]
    assert out.shape == (1, seq_len, embed_dim), out.shape
    assert out.dtype == jnp.float32
    assert jnp.allclose(out, ref), "mismatch vs reference"
    print("KERNEL_OK")
</pallas_src>

<mosaic_0001>
module attributes {stable_mosaic.version = 11 : i64} {
  func.func @_prefix_copy_kernel(%arg0: memref<64x32xf32, #tpu.memory_space<any>>, %arg1: memref<1x8x32xf32, #tpu.memory_space<any>>, %arg2: memref<!tpu.dma_semaphore, #tpu.memory_space<semaphore_mem>>) attributes {dimension_semantics = [], scalar_prefetch = 0 : i64, scratch_operands = 1 : i64, tpu.core_type = #tpu.core_type<tc>} {
    %c0_i32 = arith.constant 0 : i32
    %c0_i32_0 = arith.constant 0 : i32
    %c0_i32_1 = arith.constant 0 : i32
    %0 = tpu.memref_slice %arg0[%c0_i32_0, %c0_i32_1] : memref<64x32xf32, #tpu.memory_space<any>> -> memref<8x32xf32, #tpu.memory_space<any>>
    %c0_i32_2 = arith.constant 0 : i32
    %c0_i32_3 = arith.constant 0 : i32
    %1 = tpu.memref_slice %arg1[%c0_i32, %c0_i32_2, %c0_i32_3] : memref<1x8x32xf32, #tpu.memory_space<any>> -> memref<1x8x32xf32, #tpu.memory_space<any>>
    %2 = tpu.memref_squeeze %1 : memref<1x8x32xf32, #tpu.memory_space<any>> -> memref<8x32xf32, #tpu.memory_space<any>>
    tpu.enqueue_dma source(%0 : memref<8x32xf32, #tpu.memory_space<any>>) target(%2 : memref<8x32xf32, #tpu.memory_space<any>>) target_semaphore(%arg2 : memref<!tpu.dma_semaphore, #tpu.memory_space<semaphore_mem>>)
    %c0_i32_4 = arith.constant 0 : i32
    %c0_i32_5 = arith.constant 0 : i32
    %c0_i32_6 = arith.constant 0 : i32
    %3 = tpu.memref_slice %arg0[%c0_i32_5, %c0_i32_6] : memref<64x32xf32, #tpu.memory_space<any>> -> memref<8x32xf32, #tpu.memory_space<any>>
    %c0_i32_7 = arith.constant 0 : i32
    %c0_i32_8 = arith.constant 0 : i32
    %4 = tpu.memref_slice %arg1[%c0_i32_4, %c0_i32_7, %c0_i32_8] : memref<1x8x32xf32, #tpu.memory_space<any>> -> memref<1x8x32xf32, #tpu.memory_space<any>>
    %5 = tpu.memref_squeeze %4 : memref<1x8x32xf32, #tpu.memory_space<any>> -> memref<8x32xf32, #tpu.memory_space<any>>
    tpu.wait_dma2 semaphore(%arg2 : memref<!tpu.dma_semaphore, #tpu.memory_space<semaphore_mem>>) src(%3 : memref<8x32xf32, #tpu.memory_space<any>>) dst(%5 : memref<8x32xf32, #tpu.memory_space<any>>)
    return
  }
}

</mosaic_0001>

<llo_original>
// kernel: tpu_custom_call.1
$region0: #{tpu_custom_call.1}
  #allocation0 [shape = 'u32[]', space=smem, size = 0x4, offset = 0x4, fixed_abs, tag = 'smem constant byte address 0x4 - core index']
  #allocation1 [shape = 'u32[144,128]{1,0:T(1,128)}', space=vmem, size = 0x12000, scoped, tag = 'internal scratch']
  #allocation2 [shape = 's32[1]{0}', space=sflag, size = 0x4, scoped, tag = 'scratch operand']
  #allocation3 [shape = 's32[]', space=sflag, size = 0x4, offset = 0, fixed_abs, tag = 'sflag constant byte address 0x0 - dummy sync flag']
  #allocation4 [shape = 's32[]', space=sflag, size = 0x4, offset = 0, fixed_abs, tag = 'sflag constant byte address 0x0 - dummy sync flag']
  #allocation5 [shape = 'u32[]', space=smem, size = 0x4, offset = 0x44, fixed_abs, tag = 'smem constant byte address 0x44 - assertion arg 0']
  #allocation6 [shape = 'u32[]', space=smem, size = 0x4, offset = 0x48, fixed_abs, tag = 'smem constant byte address 0x48 - assertion arg 1']
  %s0 = inlined_call_operand.vmem [shape: f32[64,32], index: 0, kind: input, shape index: {}]
  %s1 = inlined_call_operand.hbm [shape: f32[1,8,32], index: 1, kind: output, shape index: {}]
  %s2 = sld [smem:[#allocation0]]
  $region6: #{tpu_custom_call.1} parent=0
    _
  %s4 = ssub.s32 1, %s2
  %s5 = scalar_select 0, %s4, %s2
  // Predicated region
  $region2: #{tpu_custom_call.1} parent=0 // pred_check
    _
  $region3: #{tpu_custom_call.1} parent=0 // pred_check_branch
    %7 = sbr.rel target = $region5
  $region4: #{tpu_custom_call.1} parent=0 // pred_region
    %8 = sst [smem:[#allocation5]] [#allocation4]
    %9 = sst [smem:[#allocation6]] [#allocation3]
  $region5: #{tpu_custom_call.1} parent=0 // pred_fallthru
    _
  %11 = shalt.err (0)
  %s13 = sshll.u32 %s0, 4
  %s14 = int_to_ptr.vmem [resolvable:$true] %s13
  %16 = dma.vmem_to_hbm [thread:$0]  %s14, 128, %s1, [#allocation2]
  %s17 = smul.u32 8, 1
  %s18 = sshll.u32 %s17, 4
  %19 = dma.done [#allocation2], %s18
  %20 = vsyncmov [#allocation2]
  %s21 = vpop.sfrf %20
  %p22 = scmp.eq.s32.totalorder %s21, 0
  %p23 = pneg %p22
  %25 = shalt.err (%p23)

</llo_original>
